<compile_context>
chip_gen: v5e
topology: v5e:2x2
jax: 0.10.0
libtpu: 0.0.40
codegen_flags: <defaults>
</compile_context>

<pallas_src>
import jax
import jax.numpy as jnp
import numpy as np
from jax.experimental import pallas as pl
from jax.experimental.pallas import tpu as pltpu

FC1 = 400
FC2 = 300
LANE = 128
SUBLANE = 8

FC1_P = 512   # 400 padded to lane multiple
FC2_P = 384   # 300 padded to lane multiple


def _round_up(x, m):
    return ((x + m - 1) // m) * m


def actor_mlp_kernel(x_ref, w1_ref, b1_ref, w2_ref, b2_ref, w3_ref, b3_ref, out_ref):
    """One batch tile of the 3-layer MLP.

    x_ref:  (tb, S)      bf16   (S = real num_states, unpadded)
    w*_ref: bf16 weights (in, out), VMEM-resident (constant index_map)
    b*_ref: (1, out)     f32
    out_ref:(tb, A)      f32    (A = real num_actions, unpadded)
    MXU inputs are bf16, accumulation is f32; relu runs in f32 (v5e-safe),
    hidden activations are stored bf16 between layers.
    """
    x = x_ref[...]                                                    # (tb, S) bf16

    h1 = jnp.dot(x, w1_ref[...], preferred_element_type=jnp.float32) + b1_ref[...]
    h1 = jnp.maximum(h1, 0.0).astype(jnp.bfloat16)                    # (tb, FC1_P)

    h2 = jnp.dot(h1, w2_ref[...], preferred_element_type=jnp.float32) + b2_ref[...]
    h2 = jnp.maximum(h2, 0.0).astype(jnp.bfloat16)                    # (tb, FC2_P)

    y = jnp.dot(h2, w3_ref[...], preferred_element_type=jnp.float32) + b3_ref[...]
    out_ref[...] = jnp.tanh(y).astype(out_ref.dtype)                  # (tb, A)


def actor_forward(state, params, *, tile_b=1024):
    """state: (B, num_states) f32 -> (B, num_actions) f32."""
    w1, b1, w2, b2, w3, b3 = params
    B, S = state.shape
    A = w3.shape[1]          # real num_actions (unpadded)

    # Pad batch only to the sublane multiple (<= 7 extra rows).
    B_P = _round_up(max(B, 1), SUBLANE)

    # Tile size: big enough to amortize per-step overhead, but capped so the
    # grid has >= 2 steps when the batch allows it (v7x megacore sharding).
    half = _round_up(pl.cdiv(B_P, 2), SUBLANE)
    tb = max(SUBLANE, min(tile_b, half))
    grid = (pl.cdiv(B_P, tb),)

    # Cast to bf16 in the wrapper (halves input DMA bytes); tiny batch pad.
    x = state.astype(jnp.bfloat16)
    if B_P != B:
        x = jnp.pad(x, ((0, B_P - B), (0, 0)))

    out_padded = pl.pallas_call(
        actor_mlp_kernel,
        out_shape=jax.ShapeDtypeStruct((B_P, A), jnp.float32),
        grid_spec=pltpu.PrefetchScalarGridSpec(
            num_scalar_prefetch=0,
            grid=grid,
            in_specs=[
                # batch-tiled activations; last dim = real num_states
                pl.BlockSpec((tb, S), lambda i: (i, 0)),
                # weights / biases: constant index_map -> VMEM-resident
                pl.BlockSpec((S, FC1_P), lambda i: (0, 0)),
                pl.BlockSpec((1, FC1_P), lambda i: (0, 0)),
                pl.BlockSpec((FC1_P, FC2_P), lambda i: (0, 0)),
                pl.BlockSpec((1, FC2_P), lambda i: (0, 0)),
                pl.BlockSpec((FC2_P, A), lambda i: (0, 0)),
                pl.BlockSpec((1, A), lambda i: (0, 0)),
            ],
            # output block at the real action width (no padded write-back)
            out_specs=pl.BlockSpec((tb, A), lambda i: (i, 0)),
        ),
        compiler_params=pltpu.CompilerParams(
            dimension_semantics=("parallel",),   # shard batch tiles across TCs
        ),
    )(x, w1, b1, w2, b2, w3, b3)

    return out_padded[:B]


def init_params(key, num_states, num_actions):
    """Deterministic init mirroring ActorNetwork.reset_parameters():
      fc1/fc2 weights ~ U(-1/sqrt(out_features), +) (the reference uses
        weight.size()[0], which is out_features for a PyTorch Linear),
      fc3 weights ~ U(-3e-3, 3e-3),
      biases keep the PyTorch Linear default U(-1/sqrt(in_features), +).

    Layout: weights bf16 (in, out) with ONLY the hidden dims zero-padded to
    lane multiples (num_states and num_actions stay unpadded); biases f32
    (1, out). Padded bias/weight entries are exactly 0 so ReLU keeps the
    padded hidden lanes at 0 and they contribute nothing downstream.
    """
    k1, k2, k3, kb1, kb2, kb3 = jax.random.split(key, 6)

    lim1 = 1.0 / np.sqrt(FC1)
    lim2 = 1.0 / np.sqrt(FC2)
    lim3 = 3e-3

    w1_d = jax.random.uniform(k1, (num_states, FC1), jnp.float32, -lim1, lim1)
    w2_d = jax.random.uniform(k2, (FC1, FC2), jnp.float32, -lim2, lim2)
    w3_d = jax.random.uniform(k3, (FC2, num_actions), jnp.float32, -lim3, lim3)

    b1_d = jax.random.uniform(kb1, (1, FC1), jnp.float32,
                              -1.0 / np.sqrt(num_states), 1.0 / np.sqrt(num_states))
    b2_d = jax.random.uniform(kb2, (1, FC2), jnp.float32,
                              -1.0 / np.sqrt(FC1), 1.0 / np.sqrt(FC1))
    b3_d = jax.random.uniform(kb3, (1, num_actions), jnp.float32,
                              -1.0 / np.sqrt(FC2), 1.0 / np.sqrt(FC2))

    w1 = jnp.zeros((num_states, FC1_P), jnp.float32).at[:, :FC1].set(w1_d)
    w2 = jnp.zeros((FC1_P, FC2_P), jnp.float32).at[:FC1, :FC2].set(w2_d)
    w3 = jnp.zeros((FC2_P, num_actions), jnp.float32).at[:FC2, :].set(w3_d)

    b1 = jnp.zeros((1, FC1_P), jnp.float32).at[:, :FC1].set(b1_d)
    b2 = jnp.zeros((1, FC2_P), jnp.float32).at[:, :FC2].set(b2_d)
    b3 = b3_d

    # bf16 weights -> ~2x MXU rate on v6e/v7x and half the weight DMA bytes.
    return (w1.astype(jnp.bfloat16), b1,
            w2.astype(jnp.bfloat16), b2,
            w3.astype(jnp.bfloat16), b3)


def reference_forward(state, params):
    """Pure-JAX reference mirroring the kernel's bf16-input / f32-accumulate
    matmuls (bf16-round MXU inputs and the stored hidden activations)."""
    w1, b1, w2, b2, w3, b3 = params
    hp = jax.lax.Precision.HIGHEST

    def rnd(a):  # bf16 rounding as seen by the MXU inputs / stored activations
        return a.astype(jnp.bfloat16).astype(jnp.float32)

    x = rnd(state)
    h1 = rnd(jnp.maximum(jnp.dot(x, w1.astype(jnp.float32), precision=hp) + b1, 0.0))
    h2 = rnd(jnp.maximum(jnp.dot(h1, w2.astype(jnp.float32), precision=hp) + b2, 0.0))
    y = jnp.tanh(jnp.dot(h2, w3.astype(jnp.float32), precision=hp) + b3)
    return y


if __name__ == "__main__":
    batch = 2
    num_states = 8
    num_actions = 4

    key = jax.random.PRNGKey(0)
    k_params, k_state = jax.random.split(key)

    params = init_params(k_params, num_states, num_actions)
    state = jax.random.normal(k_state, (batch, num_states), jnp.float32)

    out = actor_forward(state, params)
    out = jax.block_until_ready(out)

    ref = reference_forward(state, params)
    np.testing.assert_allclose(np.asarray(out), np.asarray(ref),
                               rtol=1e-3, atol=1e-4)

    print("KERNEL_OK")
</pallas_src>

<mosaic_0001>
module attributes {stable_mosaic.version = 11 : i64} {
  func.func @actor_mlp_kernel(%arg0: i32, %arg1: memref<8x8xbf16, #tpu.memory_space<vmem>>, %arg2: memref<8x512xbf16, #tpu.memory_space<vmem>>, %arg3: memref<1x512xf32, #tpu.memory_space<vmem>>, %arg4: memref<512x384xbf16, #tpu.memory_space<vmem>>, %arg5: memref<1x384xf32, #tpu.memory_space<vmem>>, %arg6: memref<384x4xbf16, #tpu.memory_space<vmem>>, %arg7: memref<1x4xf32, #tpu.memory_space<vmem>>, %arg8: memref<8x4xf32, #tpu.memory_space<vmem>>) attributes {dimension_semantics = [#tpu.dimension_semantics<parallel>], iteration_bounds = array<i64: 1>, scalar_prefetch = 0 : i64, scratch_operands = 0 : i64, tpu.core_type = #tpu.core_type<tc>, window_params = [{transform_indices = @transform_0, window_bounds = array<i64: 8, 8>}, {pipeline_mode = #tpu.pipeline_mode<synchronous>, transform_indices = @transform_1, window_bounds = array<i64: 8, 512>}, {pipeline_mode = #tpu.pipeline_mode<synchronous>, transform_indices = @transform_2, window_bounds = array<i64: 1, 512>}, {pipeline_mode = #tpu.pipeline_mode<synchronous>, transform_indices = @transform_3, window_bounds = array<i64: 512, 384>}, {pipeline_mode = #tpu.pipeline_mode<synchronous>, transform_indices = @transform_4, window_bounds = array<i64: 1, 384>}, {pipeline_mode = #tpu.pipeline_mode<synchronous>, transform_indices = @transform_5, window_bounds = array<i64: 384, 4>}, {pipeline_mode = #tpu.pipeline_mode<synchronous>, transform_indices = @transform_6, window_bounds = array<i64: 1, 4>}, {transform_indices = @transform_7, window_bounds = array<i64: 8, 4>}]} {
    %c0 = arith.constant 0 : index
    %c0_0 = arith.constant 0 : index
    %0 = vector.load %arg1[%c0, %c0_0] : memref<8x8xbf16, #tpu.memory_space<vmem>>, vector<8x8xbf16>
    %c0_1 = arith.constant 0 : index
    %c0_2 = arith.constant 0 : index
    %1 = vector.load %arg2[%c0_1, %c0_2] : memref<8x512xbf16, #tpu.memory_space<vmem>>, vector<8x512xbf16>
    %cst = arith.constant dense<0.000000e+00> : vector<8x512xf32>
    %2 = tpu.matmul %0, %1, %cst {dimension_numbers = #tpu.dot_dimension_numbers<[1], [0], [0], [1], [0, 0, 1, 1], [], []>} : vector<8x8xbf16>, vector<8x512xbf16>, vector<8x512xf32> -> vector<8x512xf32>
    %c0_3 = arith.constant 0 : index
    %c0_4 = arith.constant 0 : index
    %3 = vector.load %arg3[%c0_3, %c0_4] : memref<1x512xf32, #tpu.memory_space<vmem>>, vector<1x512xf32>
    %4 = vector.broadcast %3 : vector<1x512xf32> to vector<8x512xf32>
    %5 = arith.addf %2, %4 : vector<8x512xf32>
    %cst_5 = arith.constant 0.000000e+00 : f32
    %6 = vector.broadcast %cst_5 : f32 to vector<8x512xf32>
    %7 = arith.maximumf %5, %6 : vector<8x512xf32>
    %8 = arith.truncf %7 : vector<8x512xf32> to vector<8x512xbf16>
    %c0_6 = arith.constant 0 : index
    %c0_7 = arith.constant 0 : index
    %9 = vector.load %arg4[%c0_6, %c0_7] : memref<512x384xbf16, #tpu.memory_space<vmem>>, vector<512x384xbf16>
    %cst_8 = arith.constant dense<0.000000e+00> : vector<8x384xf32>
    %10 = tpu.matmul %8, %9, %cst_8 {dimension_numbers = #tpu.dot_dimension_numbers<[1], [0], [0], [1], [0, 0, 1, 1], [], []>} : vector<8x512xbf16>, vector<512x384xbf16>, vector<8x384xf32> -> vector<8x384xf32>
    %c0_9 = arith.constant 0 : index
    %c0_10 = arith.constant 0 : index
    %11 = vector.load %arg5[%c0_9, %c0_10] : memref<1x384xf32, #tpu.memory_space<vmem>>, vector<1x384xf32>
    %12 = vector.broadcast %11 : vector<1x384xf32> to vector<8x384xf32>
    %13 = arith.addf %10, %12 : vector<8x384xf32>
    %cst_11 = arith.constant 0.000000e+00 : f32
    %14 = vector.broadcast %cst_11 : f32 to vector<8x384xf32>
    %15 = arith.maximumf %13, %14 : vector<8x384xf32>
    %16 = arith.truncf %15 : vector<8x384xf32> to vector<8x384xbf16>
    %c0_12 = arith.constant 0 : index
    %c0_13 = arith.constant 0 : index
    %17 = vector.load %arg6[%c0_12, %c0_13] : memref<384x4xbf16, #tpu.memory_space<vmem>>, vector<384x4xbf16>
    %cst_14 = arith.constant dense<0.000000e+00> : vector<8x4xf32>
    %18 = tpu.matmul %16, %17, %cst_14 {dimension_numbers = #tpu.dot_dimension_numbers<[1], [0], [0], [1], [0, 0, 1, 1], [], []>} : vector<8x384xbf16>, vector<384x4xbf16>, vector<8x4xf32> -> vector<8x4xf32>
    %c0_15 = arith.constant 0 : index
    %c0_16 = arith.constant 0 : index
    %19 = vector.load %arg7[%c0_15, %c0_16] : memref<1x4xf32, #tpu.memory_space<vmem>>, vector<1x4xf32>
    %20 = vector.broadcast %19 : vector<1x4xf32> to vector<8x4xf32>
    %21 = arith.addf %18, %20 : vector<8x4xf32>
    %22 = math.tanh %21 : vector<8x4xf32>
    %c0_17 = arith.constant 0 : index
    %c0_18 = arith.constant 0 : index
    %23 = vector.load %arg8[%c0_17, %c0_18] : memref<8x4xf32, #tpu.memory_space<vmem>>, vector<8x4xf32>
    tpu.vector_store %arg8[%c0_17, %c0_18], %22 {strides = array<i32>} : memref<8x4xf32, #tpu.memory_space<vmem>>, vector<8x4xf32>,
    return
  }
  func.func @transform_0(%arg0: i32) -> (i32, i32) {
    %c0_i32 = arith.constant 0 : i32
    %c0_i32_0 = arith.constant 0 : i32
    return %arg0, %c0_i32 : i32, i32
  }
  func.func @transform_1(%arg0: i32) -> (i32, i32) {
    %c0_i32 = arith.constant 0 : i32
    %c0_i32_0 = arith.constant 0 : i32
    %c0_i32_1 = arith.constant 0 : i32
    return %c0_i32, %c0_i32_0 : i32, i32
  }
  func.func @transform_2(%arg0: i32) -> (i32, i32) {
    %c0_i32 = arith.constant 0 : i32
    %c0_i32_0 = arith.constant 0 : i32
    %c0_i32_1 = arith.constant 0 : i32
    return %c0_i32, %c0_i32_0 : i32, i32
  }
  func.func @transform_3(%arg0: i32) -> (i32, i32) {
    %c0_i32 = arith.constant 0 : i32
    %c0_i32_0 = arith.constant 0 : i32
    %c0_i32_1 = arith.constant 0 : i32
    return %c0_i32, %c0_i32_0 : i32, i32
  }
  func.func @transform_4(%arg0: i32) -> (i32, i32) {
    %c0_i32 = arith.constant 0 : i32
    %c0_i32_0 = arith.constant 0 : i32
    %c0_i32_1 = arith.constant 0 : i32
    return %c0_i32, %c0_i32_0 : i32, i32
  }
  func.func @transform_5(%arg0: i32) -> (i32, i32) {
    %c0_i32 = arith.constant 0 : i32
    %c0_i32_0 = arith.constant 0 : i32
    %c0_i32_1 = arith.constant 0 : i32
    return %c0_i32, %c0_i32_0 : i32, i32
  }
  func.func @transform_6(%arg0: i32) -> (i32, i32) {
    %c0_i32 = arith.constant 0 : i32
    %c0_i32_0 = arith.constant 0 : i32
    %c0_i32_1 = arith.constant 0 : i32
    return %c0_i32, %c0_i32_0 : i32, i32
  }
  func.func @transform_7(%arg0: i32) -> (i32, i32) {
    %c0_i32 = arith.constant 0 : i32
    %c0_i32_0 = arith.constant 0 : i32
    return %arg0, %c0_i32 : i32, i32
  }
}

</mosaic_0001>

<llo_original>
// kernel: tpu_custom_call.1
$region0: #{tpu_custom_call.1}
  #allocation0 [shape = 'u32[]', space=smem, size = 0x4, offset = 0x4, fixed_abs, tag = 'smem constant byte address 0x4 - core index']
  #allocation1 [shape = 'u32[72,128]{1,0:T(1,128)}', space=vmem, size = 0x9000, scoped, tag = 'internal scratch']
  %s0 = inlined_call_operand.vmem [shape: bf16[8,8], index: 0, kind: input, shape index: {}]
  %s1 = inlined_call_operand.vmem [shape: bf16[8,512], index: 1, kind: input, shape index: {}]
  %s2 = inlined_call_operand.vmem [shape: f32[1,512], index: 2, kind: input, shape index: {}]
  %s3 = inlined_call_operand.hbm [shape: bf16[512,384], index: 3, kind: input, shape index: {}]
  %s4 = inlined_call_operand.vmem [shape: f32[1,384], index: 4, kind: input, shape index: {}]
  %s5 = inlined_call_operand.vmem [shape: bf16[384,4], index: 5, kind: input, shape index: {}]
  %s6 = inlined_call_operand.vmem [shape: f32[1,4], index: 6, kind: input, shape index: {}]
  %s7 = inlined_call_operand.vmem [shape: f32[8,4], index: 7, kind: output, shape index: {}]
  %s8 = sld [smem:[#allocation0]]
  $region42: #{tpu_custom_call.1} parent=0
    _
  %s10 = ssub.s32 1, %s8
  %s11 = scalar_select 0, %s10, %s8
  $region1: #{tpu_custom_call.1} parent=0
    #allocation2 [shape = 'u8[393216]{0}', space=vmem, size = 0x60000, scoped, tag = 'input window, operand 3, single buffered']
    #allocation3 [shape = 's32[1]{0}', space=sflag, size = 0x4, scoped, tag = 'scoped memory for tpu_custom_call.1']
    %12 = vsyncpa [#allocation3], 0
    // Predicated region
    $region2: #{tpu_custom_call.1} parent=1 // pred_check
      _
    $region3: #{tpu_custom_call.1} parent=1 // pred_check_branch
      %14 = sbr.rel (0) target = $region5
    $region4: #{tpu_custom_call.1} parent=1 // pred_region
      _
    $region5: #{tpu_custom_call.1} parent=1 // pred_fallthru
      _
    // Predicated region
    $region6: #{tpu_custom_call.1} parent=1 // pred_check
      _
    $region7: #{tpu_custom_call.1} parent=1 // pred_check_branch
      %16 = sbr.rel (0) target = $region9
    $region8: #{tpu_custom_call.1} parent=1 // pred_region
      _
    $region9: #{tpu_custom_call.1} parent=1 // pred_fallthru
      _
    // Predicated region
    $region10: #{tpu_custom_call.1} parent=1 // pred_check
      _
    $region11: #{tpu_custom_call.1} parent=1 // pred_check_branch
      %18 = sbr.rel (0) target = $region13
    $region12: #{tpu_custom_call.1} parent=1 // pred_region
      _
    $region13: #{tpu_custom_call.1} parent=1 // pred_fallthru
      _
    // Predicated region
    $region14: #{tpu_custom_call.1} parent=1 // pred_check
      _
    $region15: #{tpu_custom_call.1} parent=1 // pred_check_branch
      %20 = sbr.rel (0) target = $region17
    $region16: #{tpu_custom_call.1} parent=1 // pred_region
      %22 = vsyncadd [#allocation3], 0
      %s23 = sshll.u32 %s3, 4
      %s24 = int_to_ptr.hbm [resolvable:$true] %s23
      %s25 = sshll.u32 [#allocation2], 4
      %s26 = int_to_ptr.vmem [resolvable:$true] %s25
      %31 = dma.hbm_to_vmem [thread:$0]  %s24, 12288, %s26, [#allocation3], 192, 192, 12
    $region17: #{tpu_custom_call.1} parent=1 // pred_fallthru
      _
    // Predicated region
    $region18: #{tpu_custom_call.1} parent=1 // pred_check
      _
    $region19: #{tpu_custom_call.1} parent=1 // pred_check_branch
      %33 = sbr.rel (0) target = $region21
    $region20: #{tpu_custom_call.1} parent=1 // pred_region
      _
    $region21: #{tpu_custom_call.1} parent=1 // pred_fallthru
      _
    // Predicated region
    $region22: #{tpu_custom_call.1} parent=1 // pred_check
      _
    $region23: #{tpu_custom_call.1} parent=1 // pred_check_branch
      %35 = sbr.rel (0) target = $region25
    $region24: #{tpu_custom_call.1} parent=1 // pred_region
      _
    $region25: #{tpu_custom_call.1} parent=1 // pred_fallthru
      _
    // Predicated region
    $region26: #{tpu_custom_call.1} parent=1 // pred_check
      _
    $region27: #{tpu_custom_call.1} parent=1 // pred_check_branch
      %37 = sbr.rel (0) target = $region29
    $region28: #{tpu_custom_call.1} parent=1 // pred_region
      _
    $region29: #{tpu_custom_call.1} parent=1 // pred_fallthru
      _
    // Predicated region
    $region30: #{tpu_custom_call.1} parent=1 // pred_check
      _
    $region31: #{tpu_custom_call.1} parent=1 // pred_check_branch
      %39 = sbr.rel (0) target = $region33
    $region32: #{tpu_custom_call.1} parent=1 // pred_region
      %41 = dma.done [#allocation3], 12288
    $region33: #{tpu_custom_call.1} parent=1 // pred_fallthru
      _
    %v43 = vld [vmem:[%s0] sm:$0xf]
    %v44 = vld [vmem:[%s1] sm:$0xff]
    %v45 = vld [vmem:[%s1 + $0x8] sm:$0xff]
    %v46 = vld [vmem:[%s2] sm:$0xf]
    %v48 = vperm.slane %v46, 0
    %v49 = vperm.slane %v46, 1
    %v50 = vperm.slane %v46, 2
    %v51 = vperm.slane %v46, 3
    %v58 = vunpack.c.l.b16 %v44
    %v59 = vunpack.c.h.b16 %v44
    %v60 = vunpack.c.l.b16 %v45
    %v61 = vunpack.c.h.b16 %v45
    %v62 = vpack.c.b16 %v58, %v58
    %v63 = vpack.c.b16 %v59, %v59
    %v64 = vpack.c.b16 %v60, %v60
    %v65 = vpack.c.b16 %v61, %v61
    %vm66 = vcmask 64512
    %v68 = vsel %vm66, %v43, 0
    %vm70 = vcmask 1043456
    %v72 = vsel %vm70, %v62, 0
    %v75 = vsel %vm70, %v63, 0
    %v78 = vsel %vm70, %v64, 0
    %v81 = vsel %vm70, %v65, 0
    %83 = vmatpush.bf16.msra.mxu0 0
    %84 = vmatpush.bf16.msra.mxu0 0
    %85 = vmatpush.bf16.msra.mxu0 0
    %86 = vmatpush.bf16.msra.mxu0 0
    %87 = vmatpush.bf16.msra.mxu0 0
    %88 = vmatpush.bf16.msra.mxu0 0
    %89 = vmatpush.bf16.msra.mxu0 0
    %90 = vmatpush.bf16.msra.mxu0 %v72
    %91 = vmatmul.bf16.gmra.mxu0 %v68
    %v92 = vpop.f32.mrf.mxu0
    %v93 = vadd.f32 %v48, %v92
    %v94 = vpop.f32.mrf.mxu0
    %95 = vdwg.mxu0
    %96 = vmatpush.bf16.msra.mxu0 0
    %97 = vmatpush.bf16.msra.mxu0 0
    %98 = vmatpush.bf16.msra.mxu0 0
    %99 = vmatpush.bf16.msra.mxu0 0
    %100 = vmatpush.bf16.msra.mxu0 0
    %101 = vmatpush.bf16.msra.mxu0 0
    %102 = vmatpush.bf16.msra.mxu0 0
    %103 = vmatpush.bf16.msra.mxu0 %v75
    %104 = vmatmul.bf16.gmra.mxu0 %v68
    %v105 = vpop.f32.mrf.mxu0
    %v106 = vadd.f32 %v49, %v105
    %v107 = vpop.f32.mrf.mxu0
    %108 = vdwg.mxu0
    %109 = vmatpush.bf16.msra.mxu0 0
    %110 = vmatpush.bf16.msra.mxu0 0
    %111 = vmatpush.bf16.msra.mxu0 0
    %112 = vmatpush.bf16.msra.mxu0 0
    %113 = vmatpush.bf16.msra.mxu0 0
    %114 = vmatpush.bf16.msra.mxu0 0
    %115 = vmatpush.bf16.msra.mxu0 0
    %116 = vmatpush.bf16.msra.mxu0 %v78
    %117 = vmatmul.bf16.gmra.mxu0 %v68
    %v118 = vpop.f32.mrf.mxu0
    %v119 = vadd.f32 %v50, %v118
    %v120 = vpop.f32.mrf.mxu0
    %121 = vdwg.mxu0
    %122 = vmatpush.bf16.msra.mxu0 0
    %123 = vmatpush.bf16.msra.mxu0 0
    %124 = vmatpush.bf16.msra.mxu0 0
    %125 = vmatpush.bf16.msra.mxu0 0
    %126 = vmatpush.bf16.msra.mxu0 0
    %127 = vmatpush.bf16.msra.mxu0 0
    %128 = vmatpush.bf16.msra.mxu0 0
    %129 = vmatpush.bf16.msra.mxu0 %v81
    %130 = vmatmul.bf16.gmra.mxu0 %v68
    %v131 = vpop.f32.mrf.mxu0
    %v132 = vadd.f32 %v51, %v131
    %v133 = vpop.f32.mrf.mxu0
    %134 = vdwg.mxu0
    %v135 = vmax.f32 %v93, 0.0
    %v136 = vmax.f32 %v106, 0.0
    %v137 = vmax.f32 %v119, 0.0
    %v138 = vmax.f32 %v132, 0.0
    %v139 = vpack.c.bf16 %v135, %v135
    %v140 = vpack.c.bf16 %v136, %v136
    %v141 = vpack.c.bf16 %v137, %v137
    %v142 = vpack.c.bf16 %v138, %v138
    %v143 = vld [vmem:[#allocation2] sm:$0xff]
    %v144 = vld [vmem:[#allocation2 + $0x8] sm:$0xf]
    %v145 = vld [vmem:[#allocation2 + $0xc] sm:$0xff]
    %v146 = vld [vmem:[#allocation2 + $0x14] sm:$0xf]
    %v147 = vld [vmem:[#allocation2 + $0x18] sm:$0xff]
    %v148 = vld [vmem:[#allocation2 + $0x20] sm:$0xf]
    %v149 = vld [vmem:[#allocation2 + $0x24] sm:$0xff]
    %v150 = vld [vmem:[#allocation2 + $0x2c] sm:$0xf]
    %v151 = vld [vmem:[#allocation2 + $0x30] sm:$0xff]
    %v152 = vld [vmem:[#allocation2 + $0x38] sm:$0xf]
    %v153 = vld [vmem:[#allocation2 + $0x3c] sm:$0xff]
    %v154 = vld [vmem:[#allocation2 + $0x44] sm:$0xf]
    %v155 = vld [vmem:[#allocation2 + $0x48] sm:$0xff]
    %v156 = vld [vmem:[#allocation2 + $0x50] sm:$0xf]
    %v157 = vld [vmem:[#allocation2 + $0x54] sm:$0xff]
    %v158 = vld [vmem:[#allocation2 + $0x5c] sm:$0xf]
    %v159 = vld [vmem:[#allocation2 + $0x60] sm:$0xff]
    %v160 = vld [vmem:[#allocation2 + $0x68] sm:$0xf]
    %v161 = vld [vmem:[#allocation2 + $0x6c] sm:$0xff]
    %v162 = vld [vmem:[#allocation2 + $0x74] sm:$0xf]
    %v163 = vld [vmem:[#allocation2 + $0x78] sm:$0xff]
    %v164 = vld [vmem:[#allocation2 + $0x80] sm:$0xf]
    %v165 = vld [vmem:[#allocation2 + $0x84] sm:$0xff]
    %v166 = vld [vmem:[#allocation2 + $0x8c] sm:$0xf]
    %v167 = vld [vmem:[#allocation2 + $0x90] sm:$0xff]
    %v168 = vld [vmem:[#allocation2 + $0x98] sm:$0xf]
    %v169 = vld [vmem:[#allocation2 + $0x9c] sm:$0xff]
    %v170 = vld [vmem:[#allocation2 + $0xa4] sm:$0xf]
    %v171 = vld [vmem:[#allocation2 + $0xa8] sm:$0xff]
    %v172 = vld [vmem:[#allocation2 + $0xb0] sm:$0xf]
    %v173 = vld [vmem:[#allocation2 + $0xb4] sm:$0xff]
    %v174 = vld [vmem:[#allocation2 + $0xbc] sm:$0xf]
    %v175 = vld [vmem:[#allocation2 + $0xc0] sm:$0xff]
    %v176 = vld [vmem:[#allocation2 + $0xc8] sm:$0xf]
    %v177 = vld [vmem:[#allocation2 + $0xcc] sm:$0xff]
    %v178 = vld [vmem:[#allocation2 + $0xd4] sm:$0xf]
    %v179 = vld [vmem:[#allocation2 + $0xd8] sm:$0xff]
    %v180 = vld [vmem:[#allocation2 + $0xe0] sm:$0xf]
    %v181 = vld [vmem:[#allocation2 + $0xe4] sm:$0xff]
    %v182 = vld [vmem:[#allocation2 + $0xec] sm:$0xf]
    %v183 = vld [vmem:[#allocation2 + $0xf0] sm:$0xff]
    %v184 = vld [vmem:[#allocation2 + $0xf8] sm:$0xf]
    %v185 = vld [vmem:[#allocation2 + $0xfc] sm:$0xff]
    %v186 = vld [vmem:[#allocation2 + $0x104] sm:$0xf]
    %v187 = vld [vmem:[#allocation2 + $0x108] sm:$0xff]
    %v188 = vld [vmem:[#allocation2 + $0x110] sm:$0xf]
    %v189 = vld [vmem:[#allocation2 + $0x114] sm:$0xff]
    %v190 = vld [vmem:[#allocation2 + $0x11c] sm:$0xf]
    %v191 = vld [vmem:[#allocation2 + $0x120] sm:$0xff]
    %v192 = vld [vmem:[#allocation2 + $0x128] sm:$0xf]
    %v193 = vld [vmem:[#allocation2 + $0x12c] sm:$0xff]
    %v194 = vld [vmem:[#allocation2 + $0x134] sm:$0xf]
    %v195 = vld [vmem:[#allocation2 + $0x138] sm:$0xff]
    %v196 = vld [vmem:[#allocation2 + $0x140] sm:$0xf]
    %v197 = vld [vmem:[#allocation2 + $0x144] sm:$0xff]
    %v198 = vld [vmem:[#allocation2 + $0x14c] sm:$0xf]
    %v199 = vld [vmem:[#allocation2 + $0x150] sm:$0xff]
    %v200 = vld [vmem:[#allocation2 + $0x158] sm:$0xf]
    %v201 = vld [vmem:[#allocation2 + $0x15c] sm:$0xff]
    %v202 = vld [vmem:[#allocation2 + $0x164] sm:$0xf]
    %v203 = vld [vmem:[#allocation2 + $0x168] sm:$0xff]
    %v204 = vld [vmem:[#allocation2 + $0x170] sm:$0xf]
    %v205 = vld [vmem:[#allocation2 + $0x174] sm:$0xff]
    %v206 = vld [vmem:[#allocation2 + $0x17c] sm:$0xf]
    %v207 = vld [vmem:[#allocation2 + $0x180] sm:$0xff]
    %v208 = vld [vmem:[#allocation2 + $0x188] sm:$0xf]
    %v209 = vld [vmem:[#allocation2 + $0x18c] sm:$0xff]
    %v210 = vld [vmem:[#allocation2 + $0x194] sm:$0xf]
    %v211 = vld [vmem:[#allocation2 + $0x198] sm:$0xff]
    %v212 = vld [vmem:[#allocation2 + $0x1a0] sm:$0xf]
    %v213 = vld [vmem:[#allocation2 + $0x1a4] sm:$0xff]
    %v214 = vld [vmem:[#allocation2 + $0x1ac] sm:$0xf]
    %v215 = vld [vmem:[#allocation2 + $0x1b0] sm:$0xff]
    %v216 = vld [vmem:[#allocation2 + $0x1b8] sm:$0xf]
    %v217 = vld [vmem:[#allocation2 + $0x1bc] sm:$0xff]
    %v218 = vld [vmem:[#allocation2 + $0x1c4] sm:$0xf]
    %v219 = vld [vmem:[#allocation2 + $0x1c8] sm:$0xff]
    %v220 = vld [vmem:[#allocation2 + $0x1d0] sm:$0xf]
    %v221 = vld [vmem:[#allocation2 + $0x1d4] sm:$0xff]
    %v222 = vld [vmem:[#allocation2 + $0x1dc] sm:$0xf]
    %v223 = vld [vmem:[#allocation2 + $0x1e0] sm:$0xff]
    %v224 = vld [vmem:[#allocation2 + $0x1e8] sm:$0xf]
    %v225 = vld [vmem:[#allocation2 + $0x1ec] sm:$0xff]
    %v226 = vld [vmem:[#allocation2 + $0x1f4] sm:$0xf]
    %v227 = vld [vmem:[#allocation2 + $0x1f8] sm:$0xff]
    %v228 = vld [vmem:[#allocation2 + $0x200] sm:$0xf]
    %v229 = vld [vmem:[#allocation2 + $0x204] sm:$0xff]
    %v230 = vld [vmem:[#allocation2 + $0x20c] sm:$0xf]
    %v231 = vld [vmem:[#allocation2 + $0x210] sm:$0xff]
    %v232 = vld [vmem:[#allocation2 + $0x218] sm:$0xf]
    %v233 = vld [vmem:[#allocation2 + $0x21c] sm:$0xff]
    %v234 = vld [vmem:[#allocation2 + $0x224] sm:$0xf]
    %v235 = vld [vmem:[#allocation2 + $0x228] sm:$0xff]
    %v236 = vld [vmem:[#allocation2 + $0x230] sm:$0xf]
    %v237 = vld [vmem:[#allocation2 + $0x234] sm:$0xff]
    %v238 = vld [vmem:[#allocation2 + $0x23c] sm:$0xf]
    %v239 = vld [vmem:[#allocation2 + $0x240] sm:$0xff]
    %v240 = vld [vmem:[#allocation2 + $0x248] sm:$0xf]
    %v241 = vld [vmem:[#allocation2 + $0x24c] sm:$0xff]
    %v242 = vld [vmem:[#allocation2 + $0x254] sm:$0xf]
    %v243 = vld [vmem:[#allocation2 + $0x258] sm:$0xff]
    %v244 = vld [vmem:[#allocation2 + $0x260] sm:$0xf]
    %v245 = vld [vmem:[#allocation2 + $0x264] sm:$0xff]
    %v246 = vld [vmem:[#allocation2 + $0x26c] sm:$0xf]
    %v247 = vld [vmem:[#allocation2 + $0x270] sm:$0xff]
    %v248 = vld [vmem:[#allocation2 + $0x278] sm:$0xf]
    %v249 = vld [vmem:[#allocation2 + $0x27c] sm:$0xff]
    %v250 = vld [vmem:[#allocation2 + $0x284] sm:$0xf]
    %v251 = vld [vmem:[#allocation2 + $0x288] sm:$0xff]
    %v252 = vld [vmem:[#allocation2 + $0x290] sm:$0xf]
    %v253 = vld [vmem:[#allocation2 + $0x294] sm:$0xff]
    %v254 = vld [vmem:[#allocation2 + $0x29c] sm:$0xf]
    %v255 = vld [vmem:[#allocation2 + $0x2a0] sm:$0xff]
    %v256 = vld [vmem:[#allocation2 + $0x2a8] sm:$0xf]
    %v257 = vld [vmem:[#allocation2 + $0x2ac] sm:$0xff]
    %v258 = vld [vmem:[#allocation2 + $0x2b4] sm:$0xf]
    %v259 = vld [vmem:[#allocation2 + $0x2b8] sm:$0xff]
    %v260 = vld [vmem:[#allocation2 + $0x2c0] sm:$0xf]
    %v261 = vld [vmem:[#allocation2 + $0x2c4] sm:$0xff]
    %v262 = vld [vmem:[#allocation2 + $0x2cc] sm:$0xf]
    %v263 = vld [vmem:[#allocation2 + $0x2d0] sm:$0xff]
    %v264 = vld [vmem:[#allocation2 + $0x2d8] sm:$0xf]
    %v265 = vld [vmem:[#allocation2 + $0x2dc] sm:$0xff]
    %v266 = vld [vmem:[#allocation2 + $0x2e4] sm:$0xf]
    %v267 = vld [vmem:[#allocation2 + $0x2e8] sm:$0xff]
    %v268 = vld [vmem:[#allocation2 + $0x2f0] sm:$0xf]
    %v269 = vld [vmem:[#allocation2 + $0x2f4] sm:$0xff]
    %v270 = vld [vmem:[#allocation2 + $0x2fc] sm:$0xf]
    %v271 = vld [vmem:[%s4] sm:$0x7]
    %v273 = vperm.slane %v271, 0
    %v274 = vperm.slane %v271, 1
    %v275 = vperm.slane %v271, 2
    %v407 = vunpack.c.l.b16 %v143
    %v408 = vunpack.c.h.b16 %v143
    %v409 = vunpack.c.l.b16 %v144
    %v410 = vunpack.c.l.b16 %v145
    %v411 = vunpack.c.h.b16 %v145
    %v412 = vunpack.c.l.b16 %v146
    %v413 = vunpack.c.l.b16 %v147
    %v414 = vunpack.c.h.b16 %v147
    %v415 = vunpack.c.l.b16 %v148
    %v416 = vunpack.c.l.b16 %v149
    %v417 = vunpack.c.h.b16 %v149
    %v418 = vunpack.c.l.b16 %v150
    %v419 = vunpack.c.l.b16 %v151
    %v420 = vunpack.c.h.b16 %v151
    %v421 = vunpack.c.l.b16 %v152
    %v422 = vunpack.c.l.b16 %v153
    %v423 = vunpack.c.h.b16 %v153
    %v424 = vunpack.c.l.b16 %v154
    %v425 = vunpack.c.l.b16 %v155
    %v426 = vunpack.c.h.b16 %v155
    %v427 = vunpack.c.l.b16 %v156
    %v428 = vunpack.c.l.b16 %v157
    %v429 = vunpack.c.h.b16 %v157
    %v430 = vunpack.c.l.b16 %v158
    %v431 = vunpack.c.l.b16 %v159
    %v432 = vunpack.c.h.b16 %v159
    %v433 = vunpack.c.l.b16 %v160
    %v434 = vunpack.c.l.b16 %v161
    %v435 = vunpack.c.h.b16 %v161
    %v436 = vunpack.c.l.b16 %v162
    %v437 = vunpack.c.l.b16 %v163
    %v438 = vunpack.c.h.b16 %v163
    %v439 = vunpack.c.l.b16 %v164
    %v440 = vunpack.c.l.b16 %v165
    %v441 = vunpack.c.h.b16 %v165
    %v442 = vunpack.c.l.b16 %v166
    %v443 = vunpack.c.l.b16 %v167
    %v444 = vunpack.c.h.b16 %v167
    %v445 = vunpack.c.l.b16 %v168
    %v446 = vunpack.c.l.b16 %v169
    %v447 = vunpack.c.h.b16 %v169
    %v448 = vunpack.c.l.b16 %v170
    %v449 = vunpack.c.l.b16 %v171
    %v450 = vunpack.c.h.b16 %v171
    %v451 = vunpack.c.l.b16 %v172
    %v452 = vunpack.c.l.b16 %v173
    %v453 = vunpack.c.h.b16 %v173
    %v454 = vunpack.c.l.b16 %v174
    %v455 = vunpack.c.l.b16 %v175
    %v456 = vunpack.c.h.b16 %v175
    %v457 = vunpack.c.l.b16 %v176
    %v458 = vunpack.c.l.b16 %v177
    %v459 = vunpack.c.h.b16 %v177
    %v460 = vunpack.c.l.b16 %v178
    %v461 = vunpack.c.l.b16 %v179
    %v462 = vunpack.c.h.b16 %v179
    %v463 = vunpack.c.l.b16 %v180
    %v464 = vunpack.c.l.b16 %v181
    %v465 = vunpack.c.h.b16 %v181
    %v466 = vunpack.c.l.b16 %v182
    %v467 = vunpack.c.l.b16 %v183
    %v468 = vunpack.c.h.b16 %v183
    %v469 = vunpack.c.l.b16 %v184
    %v470 = vunpack.c.l.b16 %v185
    %v471 = vunpack.c.h.b16 %v185
    %v472 = vunpack.c.l.b16 %v186
    %v473 = vunpack.c.l.b16 %v187
    %v474 = vunpack.c.h.b16 %v187
    %v475 = vunpack.c.l.b16 %v188
    %v476 = vunpack.c.l.b16 %v189
    %v477 = vunpack.c.h.b16 %v189
    %v478 = vunpack.c.l.b16 %v190
    %v479 = vunpack.c.l.b16 %v191
    %v480 = vunpack.c.h.b16 %v191
    %v481 = vunpack.c.l.b16 %v192
    %v482 = vunpack.c.l.b16 %v193
    %v483 = vunpack.c.h.b16 %v193
    %v484 = vunpack.c.l.b16 %v194
    %v485 = vunpack.c.l.b16 %v195
    %v486 = vunpack.c.h.b16 %v195
    %v487 = vunpack.c.l.b16 %v196
    %v488 = vunpack.c.l.b16 %v197
    %v489 = vunpack.c.h.b16 %v197
    %v490 = vunpack.c.l.b16 %v198
    %v491 = vunpack.c.l.b16 %v199
    %v492 = vunpack.c.h.b16 %v199
    %v493 = vunpack.c.l.b16 %v200
    %v494 = vunpack.c.l.b16 %v201
    %v495 = vunpack.c.h.b16 %v201
    %v496 = vunpack.c.l.b16 %v202
    %v497 = vunpack.c.l.b16 %v203
    %v498 = vunpack.c.h.b16 %v203
    %v499 = vunpack.c.l.b16 %v204
    %v500 = vunpack.c.l.b16 %v205
    %v501 = vunpack.c.h.b16 %v205
    %v502 = vunpack.c.l.b16 %v206
    %v503 = vunpack.c.l.b16 %v207
    %v504 = vunpack.c.h.b16 %v207
    %v505 = vunpack.c.l.b16 %v208
    %v506 = vunpack.c.l.b16 %v209
    %v507 = vunpack.c.h.b16 %v209
    %v508 = vunpack.c.l.b16 %v210
    %v509 = vunpack.c.l.b16 %v211
    %v510 = vunpack.c.h.b16 %v211
    %v511 = vunpack.c.l.b16 %v212
    %v512 = vunpack.c.l.b16 %v213
    %v513 = vunpack.c.h.b16 %v213
    %v514 = vunpack.c.l.b16 %v214
    %v515 = vunpack.c.l.b16 %v215
    %v516 = vunpack.c.h.b16 %v215
    %v517 = vunpack.c.l.b16 %v216
    %v518 = vunpack.c.l.b16 %v217
    %v519 = vunpack.c.h.b16 %v217
    %v520 = vunpack.c.l.b16 %v218
    %v521 = vunpack.c.l.b16 %v219
    %v522 = vunpack.c.h.b16 %v219
    %v523 = vunpack.c.l.b16 %v220
    %v524 = vunpack.c.l.b16 %v221
    %v525 = vunpack.c.h.b16 %v221
    %v526 = vunpack.c.l.b16 %v222
    %v527 = vunpack.c.l.b16 %v223
    %v528 = vunpack.c.h.b16 %v223
    %v529 = vunpack.c.l.b16 %v224
    %v530 = vunpack.c.l.b16 %v225
    %v531 = vunpack.c.h.b16 %v225
    %v532 = vunpack.c.l.b16 %v226
    %v533 = vunpack.c.l.b16 %v227
    %v534 = vunpack.c.h.b16 %v227
    %v535 = vunpack.c.l.b16 %v228
    %v536 = vunpack.c.l.b16 %v229
    %v537 = vunpack.c.h.b16 %v229
    %v538 = vunpack.c.l.b16 %v230
    %v539 = vunpack.c.l.b16 %v231
    %v540 = vunpack.c.h.b16 %v231
    %v541 = vunpack.c.l.b16 %v232
    %v542 = vunpack.c.l.b16 %v233
    %v543 = vunpack.c.h.b16 %v233
    %v544 = vunpack.c.l.b16 %v234
    %v545 = vunpack.c.l.b16 %v235
    %v546 = vunpack.c.h.b16 %v235
    %v547 = vunpack.c.l.b16 %v236
    %v548 = vunpack.c.l.b16 %v237
    %v549 = vunpack.c.h.b16 %v237
    %v550 = vunpack.c.l.b16 %v238
    %v551 = vunpack.c.l.b16 %v239
    %v552 = vunpack.c.h.b16 %v239
    %v553 = vunpack.c.l.b16 %v240
    %v554 = vunpack.c.l.b16 %v241
    %v555 = vunpack.c.h.b16 %v241
    %v556 = vunpack.c.l.b16 %v242
    %v557 = vunpack.c.l.b16 %v243
    %v558 = vunpack.c.h.b16 %v243
    %v559 = vunpack.c.l.b16 %v244
    %v560 = vunpack.c.l.b16 %v245
    %v561 = vunpack.c.h.b16 %v245
    %v562 = vunpack.c.l.b16 %v246
    %v563 = vunpack.c.l.b16 %v247
    %v564 = vunpack.c.h.b16 %v247
    %v565 = vunpack.c.l.b16 %v248
    %v566 = vunpack.c.l.b16 %v249
    %v567 = vunpack.c.h.b16 %v249
    %v568 = vunpack.c.l.b16 %v250
    %v569 = vunpack.c.l.b16 %v251
    %v570 = vunpack.c.h.b16 %v251
    %v571 = vunpack.c.l.b16 %v252
    %v572 = vunpack.c.l.b16 %v253
    %v573 = vunpack.c.h.b16 %v253
    %v574 = vunpack.c.l.b16 %v254
    %v575 = vunpack.c.l.b16 %v255
    %v576 = vunpack.c.h.b16 %v255
    %v577 = vunpack.c.l.b16 %v256
    %v578 = vunpack.c.l.b16 %v257
    %v579 = vunpack.c.h.b16 %v257
    %v580 = vunpack.c.l.b16 %v258
    %v581 = vunpack.c.l.b16 %v259
    %v582 = vunpack.c.h.b16 %v259
    %v583 = vunpack.c.l.b16 %v260
    %v584 = vunpack.c.l.b16 %v261
    %v585 = vunpack.c.h.b16 %v261
    %v586 = vunpack.c.l.b16 %v262
    %v587 = vunpack.c.l.b16 %v263
    %v588 = vunpack.c.h.b16 %v263
    %v589 = vunpack.c.l.b16 %v264
    %v590 = vunpack.c.l.b16 %v265
    %v591 = vunpack.c.h.b16 %v265
    %v592 = vunpack.c.l.b16 %v266
    %v593 = vunpack.c.l.b16 %v267
    %v594 = vunpack.c.h.b16 %v267
    %v595 = vunpack.c.l.b16 %v268
    %v596 = vunpack.c.l.b16 %v269
    %v597 = vunpack.c.h.b16 %v269
    %v598 = vunpack.c.l.b16 %v270
    %v599 = vpack.c.b16 %v410, %v407
    %v600 = vpack.c.b16 %v411, %v408
    %v601 = vpack.c.b16 %v412, %v409
    %v602 = vpack.c.b16 %v416, %v413
    %v603 = vpack.c.b16 %v417, %v414
    %v604 = vpack.c.b16 %v418, %v415
    %v605 = vpack.c.b16 %v422, %v419
    %v606 = vpack.c.b16 %v423, %v420
    %v607 = vpack.c.b16 %v424, %v421
    %v608 = vpack.c.b16 %v428, %v425
    %v609 = vpack.c.b16 %v429, %v426
    %v610 = vpack.c.b16 %v430, %v427
    %v611 = vpack.c.b16 %v434, %v431
    %v612 = vpack.c.b16 %v435, %v432
    %v613 = vpack.c.b16 %v436, %v433
    %v614 = vpack.c.b16 %v440, %v437
    %v615 = vpack.c.b16 %v441, %v438
    %v616 = vpack.c.b16 %v442, %v439
    %v617 = vpack.c.b16 %v446, %v443
    %v618 = vpack.c.b16 %v447, %v444
    %v619 = vpack.c.b16 %v448, %v445
    %v620 = vpack.c.b16 %v452, %v449
    %v621 = vpack.c.b16 %v453, %v450
    %v622 = vpack.c.b16 %v454, %v451
    %v623 = vpack.c.b16 %v458, %v455
    %v624 = vpack.c.b16 %v459, %v456
    %v625 = vpack.c.b16 %v460, %v457
    %v626 = vpack.c.b16 %v464, %v461
    %v627 = vpack.c.b16 %v465, %v462
    %v628 = vpack.c.b16 %v466, %v463
    %v629 = vpack.c.b16 %v470, %v467
    %v630 = vpack.c.b16 %v471, %v468
    %v631 = vpack.c.b16 %v472, %v469
    %v632 = vpack.c.b16 %v476, %v473
    %v633 = vpack.c.b16 %v477, %v474
    %v634 = vpack.c.b16 %v478, %v475
    %v635 = vpack.c.b16 %v482, %v479
    %v636 = vpack.c.b16 %v483, %v480
    %v637 = vpack.c.b16 %v484, %v481
    %v638 = vpack.c.b16 %v488, %v485
    %v639 = vpack.c.b16 %v489, %v486
    %v640 = vpack.c.b16 %v490, %v487
    %v641 = vpack.c.b16 %v494, %v491
    %v642 = vpack.c.b16 %v495, %v492
    %v643 = vpack.c.b16 %v496, %v493
    %v644 = vpack.c.b16 %v500, %v497
    %v645 = vpack.c.b16 %v501, %v498
    %v646 = vpack.c.b16 %v502, %v499
    %v647 = vpack.c.b16 %v506, %v503
    %v648 = vpack.c.b16 %v507, %v504
    %v649 = vpack.c.b16 %v508, %v505
    %v650 = vpack.c.b16 %v512, %v509
    %v651 = vpack.c.b16 %v513, %v510
    %v652 = vpack.c.b16 %v514, %v511
    %v653 = vpack.c.b16 %v518, %v515
    %v654 = vpack.c.b16 %v519, %v516
    %v655 = vpack.c.b16 %v520, %v517
    %v656 = vpack.c.b16 %v524, %v521
    %v657 = vpack.c.b16 %v525, %v522
    %v658 = vpack.c.b16 %v526, %v523
    %v659 = vpack.c.b16 %v530, %v527
    %v660 = vpack.c.b16 %v531, %v528
    %v661 = vpack.c.b16 %v532, %v529
    %v662 = vpack.c.b16 %v536, %v533
    %v663 = vpack.c.b16 %v537, %v534
    %v664 = vpack.c.b16 %v538, %v535
    %v665 = vpack.c.b16 %v542, %v539
    %v666 = vpack.c.b16 %v543, %v540
    %v667 = vpack.c.b16 %v544, %v541
    %v668 = vpack.c.b16 %v548, %v545
    %v669 = vpack.c.b16 %v549, %v546
    %v670 = vpack.c.b16 %v550, %v547
    %v671 = vpack.c.b16 %v554, %v551
    %v672 = vpack.c.b16 %v555, %v552
    %v673 = vpack.c.b16 %v556, %v553
    %v674 = vpack.c.b16 %v560, %v557
    %v675 = vpack.c.b16 %v561, %v558
    %v676 = vpack.c.b16 %v562, %v559
    %v677 = vpack.c.b16 %v566, %v563
    %v678 = vpack.c.b16 %v567, %v564
    %v679 = vpack.c.b16 %v568, %v565
    %v680 = vpack.c.b16 %v572, %v569
    %v681 = vpack.c.b16 %v573, %v570
    %v682 = vpack.c.b16 %v574, %v571
    %v683 = vpack.c.b16 %v578, %v575
    %v684 = vpack.c.b16 %v579, %v576
    %v685 = vpack.c.b16 %v580, %v577
    %v686 = vpack.c.b16 %v584, %v581
    %v687 = vpack.c.b16 %v585, %v582
    %v688 = vpack.c.b16 %v586, %v583
    %v689 = vpack.c.b16 %v590, %v587
    %v690 = vpack.c.b16 %v591, %v588
    %v691 = vpack.c.b16 %v592, %v589
    %v692 = vpack.c.b16 %v596, %v593
    %v693 = vpack.c.b16 %v597, %v594
    %v694 = vpack.c.b16 %v598, %v595
    %791 = vmatpush.bf16.msra.mxu0 %v620
    %792 = vmatpush.bf16.msra.mxu0 %v617
    %793 = vmatpush.bf16.msra.mxu0 %v614
    %794 = vmatpush.bf16.msra.mxu0 %v611
    %795 = vmatpush.bf16.msra.mxu0 %v608
    %796 = vmatpush.bf16.msra.mxu0 %v605
    %797 = vmatpush.bf16.msra.mxu0 %v602
    %798 = vmatpush.bf16.msra.mxu0 %v599
    %799 = vmatmul.bf16.gmra.mxu0 %v139
    %v800 = vpop.f32.mrf.mxu0
    %v801 = vadd.f32 %v273, %v800
    %v802 = vpop.f32.mrf.mxu0
    %803 = vdwg.mxu0
    %804 = vmatpush.bf16.msra.mxu0 %v644
    %805 = vmatpush.bf16.msra.mxu0 %v641
    %806 = vmatpush.bf16.msra.mxu0 %v638
    %807 = vmatpush.bf16.msra.mxu0 %v635
    %808 = vmatpush.bf16.msra.mxu0 %v632
    %809 = vmatpush.bf16.msra.mxu0 %v629
    %810 = vmatpush.bf16.msra.mxu0 %v626
    %811 = vmatpush.bf16.msra.mxu0 %v623
    %812 = vmatmul.bf16.gmra.mxu0 %v140
    %v813 = vpop.f32.mrf.mxu0
    %v814 = vadd.f32 %v801, %v813
    %v815 = vpop.f32.mrf.mxu0
    %816 = vdwg.mxu0
    %817 = vmatpush.bf16.msra.mxu0 %v668
    %818 = vmatpush.bf16.msra.mxu0 %v665
    %819 = vmatpush.bf16.msra.mxu0 %v662
    %820 = vmatpush.bf16.msra.mxu0 %v659
    %821 = vmatpush.bf16.msra.mxu0 %v656
    %822 = vmatpush.bf16.msra.mxu0 %v653
    %823 = vmatpush.bf16.msra.mxu0 %v650
    %824 = vmatpush.bf16.msra.mxu0 %v647
    %825 = vmatmul.bf16.gmra.mxu0 %v141
    %v826 = vpop.f32.mrf.mxu0
    %v827 = vadd.f32 %v814, %v826
    %v828 = vpop.f32.mrf.mxu0
    %829 = vdwg.mxu0
    %830 = vmatpush.bf16.msra.mxu0 %v692
    %831 = vmatpush.bf16.msra.mxu0 %v689
    %832 = vmatpush.bf16.msra.mxu0 %v686
    %833 = vmatpush.bf16.msra.mxu0 %v683
    %834 = vmatpush.bf16.msra.mxu0 %v680
    %835 = vmatpush.bf16.msra.mxu0 %v677
    %836 = vmatpush.bf16.msra.mxu0 %v674
    %837 = vmatpush.bf16.msra.mxu0 %v671
    %838 = vmatmul.bf16.gmra.mxu0 %v142
    %v839 = vpop.f32.mrf.mxu0
    %v840 = vadd.f32 %v827, %v839
    %v841 = vpop.f32.mrf.mxu0
    %842 = vdwg.mxu0
    %843 = vmatpush.bf16.msra.mxu0 %v621
    %844 = vmatpush.bf16.msra.mxu0 %v618
    %845 = vmatpush.bf16.msra.mxu0 %v615
    %846 = vmatpush.bf16.msra.mxu0 %v612
    %847 = vmatpush.bf16.msra.mxu0 %v609
    %848 = vmatpush.bf16.msra.mxu0 %v606
    %849 = vmatpush.bf16.msra.mxu0 %v603
    %850 = vmatpush.bf16.msra.mxu0 %v600
    %851 = vmatmul.bf16.gmra.mxu0 %v139
    %v852 = vpop.f32.mrf.mxu0
    %v853 = vadd.f32 %v274, %v852
    %v854 = vpop.f32.mrf.mxu0
    %855 = vdwg.mxu0
    %856 = vmatpush.bf16.msra.mxu0 %v645
    %857 = vmatpush.bf16.msra.mxu0 %v642
    %858 = vmatpush.bf16.msra.mxu0 %v639
    %859 = vmatpush.bf16.msra.mxu0 %v636
    %860 = vmatpush.bf16.msra.mxu0 %v633
    %861 = vmatpush.bf16.msra.mxu0 %v630
    %862 = vmatpush.bf16.msra.mxu0 %v627
    %863 = vmatpush.bf16.msra.mxu0 %v624
    %864 = vmatmul.bf16.gmra.mxu0 %v140
    %v865 = vpop.f32.mrf.mxu0
    %v866 = vadd.f32 %v853, %v865
    %v867 = vpop.f32.mrf.mxu0
    %868 = vdwg.mxu0
    %869 = vmatpush.bf16.msra.mxu0 %v669
    %870 = vmatpush.bf16.msra.mxu0 %v666
    %871 = vmatpush.bf16.msra.mxu0 %v663
    %872 = vmatpush.bf16.msra.mxu0 %v660
    %873 = vmatpush.bf16.msra.mxu0 %v657
    %874 = vmatpush.bf16.msra.mxu0 %v654
    %875 = vmatpush.bf16.msra.mxu0 %v651
    %876 = vmatpush.bf16.msra.mxu0 %v648
    %877 = vmatmul.bf16.gmra.mxu0 %v141
    %v878 = vpop.f32.mrf.mxu0
    %v879 = vadd.f32 %v866, %v878
    %v880 = vpop.f32.mrf.mxu0
    %881 = vdwg.mxu0
    %882 = vmatpush.bf16.msra.mxu0 %v693
    %883 = vmatpush.bf16.msra.mxu0 %v690
    %884 = vmatpush.bf16.msra.mxu0 %v687
    %885 = vmatpush.bf16.msra.mxu0 %v684
    %886 = vmatpush.bf16.msra.mxu0 %v681
    %887 = vmatpush.bf16.msra.mxu0 %v678
    %888 = vmatpush.bf16.msra.mxu0 %v675
    %889 = vmatpush.bf16.msra.mxu0 %v672
    %890 = vmatmul.bf16.gmra.mxu0 %v142
    %v891 = vpop.f32.mrf.mxu0
    %v892 = vadd.f32 %v879, %v891
    %v893 = vpop.f32.mrf.mxu0
    %894 = vdwg.mxu0
    %895 = vmatpush.bf16.msra.mxu0 %v622
    %896 = vmatpush.bf16.msra.mxu0 %v619
    %897 = vmatpush.bf16.msra.mxu0 %v616
    %898 = vmatpush.bf16.msra.mxu0 %v613
    %899 = vmatpush.bf16.msra.mxu0 %v610
    %900 = vmatpush.bf16.msra.mxu0 %v607
    %901 = vmatpush.bf16.msra.mxu0 %v604
    %902 = vmatpush.bf16.msra.mxu0 %v601
    %903 = vmatmul.bf16.gmra.mxu0 %v139
    %v904 = vpop.f32.mrf.mxu0
    %v905 = vadd.f32 %v275, %v904
    %v906 = vpop.f32.mrf.mxu0
    %907 = vdwg.mxu0
    %908 = vmatpush.bf16.msra.mxu0 %v646
    %909 = vmatpush.bf16.msra.mxu0 %v643
    %910 = vmatpush.bf16.msra.mxu0 %v640
    %911 = vmatpush.bf16.msra.mxu0 %v637
    %912 = vmatpush.bf16.msra.mxu0 %v634
    %913 = vmatpush.bf16.msra.mxu0 %v631
    %914 = vmatpush.bf16.msra.mxu0 %v628
    %915 = vmatpush.bf16.msra.mxu0 %v625
    %916 = vmatmul.bf16.gmra.mxu0 %v140
    %v917 = vpop.f32.mrf.mxu0
    %v918 = vadd.f32 %v905, %v917
    %v919 = vpop.f32.mrf.mxu0
    %920 = vdwg.mxu0
    %921 = vmatpush.bf16.msra.mxu0 %v670
    %922 = vmatpush.bf16.msra.mxu0 %v667
    %923 = vmatpush.bf16.msra.mxu0 %v664
    %924 = vmatpush.bf16.msra.mxu0 %v661
    %925 = vmatpush.bf16.msra.mxu0 %v658
    %926 = vmatpush.bf16.msra.mxu0 %v655
    %927 = vmatpush.bf16.msra.mxu0 %v652
    %928 = vmatpush.bf16.msra.mxu0 %v649
    %929 = vmatmul.bf16.gmra.mxu0 %v141
    %v930 = vpop.f32.mrf.mxu0
    %v931 = vadd.f32 %v918, %v930
    %v932 = vpop.f32.mrf.mxu0
    %933 = vdwg.mxu0
    %934 = vmatpush.bf16.msra.mxu0 %v694
    %935 = vmatpush.bf16.msra.mxu0 %v691
    %936 = vmatpush.bf16.msra.mxu0 %v688
    %937 = vmatpush.bf16.msra.mxu0 %v685
    %938 = vmatpush.bf16.msra.mxu0 %v682
    %939 = vmatpush.bf16.msra.mxu0 %v679
    %940 = vmatpush.bf16.msra.mxu0 %v676
    %941 = vmatpush.bf16.msra.mxu0 %v673
    %942 = vmatmul.bf16.gmra.mxu0 %v142
    %v943 = vpop.f32.mrf.mxu0
    %v944 = vadd.f32 %v931, %v943
    %v945 = vpop.f32.mrf.mxu0
    %946 = vdwg.mxu0
    %v947 = vmax.f32 %v840, 0.0
    %v948 = vmax.f32 %v892, 0.0
    %v949 = vmax.f32 %v944, 0.0
    %v950 = vpack.c.bf16 %v947, %v947
    %v951 = vpack.c.bf16 %v948, %v948
    %v952 = vpack.c.bf16 %v949, %v949
    %v953 = vld [vmem:[%s5] sm:$0xf]
    %v954 = vld [vmem:[%s5 + $0x4] sm:$0xf]
    %v955 = vld [vmem:[%s5 + $0x8] sm:$0xf]
    %v956 = vld [vmem:[%s5 + $0xc] sm:$0xf]
    %v957 = vld [vmem:[%s5 + $0x10] sm:$0xf]
    %v958 = vld [vmem:[%s5 + $0x14] sm:$0xf]
    %v959 = vld [vmem:[%s5 + $0x18] sm:$0xf]
    %v960 = vld [vmem:[%s5 + $0x1c] sm:$0xf]
    %v961 = vld [vmem:[%s5 + $0x20] sm:$0xf]
    %v962 = vld [vmem:[%s5 + $0x24] sm:$0xf]
    %v963 = vld [vmem:[%s5 + $0x28] sm:$0xf]
    %v964 = vld [vmem:[%s5 + $0x2c] sm:$0xf]
    %v965 = vld [vmem:[%s5 + $0x30] sm:$0xf]
    %v966 = vld [vmem:[%s5 + $0x34] sm:$0xf]
    %v967 = vld [vmem:[%s5 + $0x38] sm:$0xf]
    %v968 = vld [vmem:[%s5 + $0x3c] sm:$0xf]
    %v969 = vld [vmem:[%s5 + $0x40] sm:$0xf]
    %v970 = vld [vmem:[%s5 + $0x44] sm:$0xf]
    %v971 = vld [vmem:[%s5 + $0x48] sm:$0xf]
    %v972 = vld [vmem:[%s5 + $0x4c] sm:$0xf]
    %v973 = vld [vmem:[%s5 + $0x50] sm:$0xf]
    %v974 = vld [vmem:[%s5 + $0x54] sm:$0xf]
    %v975 = vld [vmem:[%s5 + $0x58] sm:$0xf]
    %v976 = vld [vmem:[%s5 + $0x5c] sm:$0xf]
    %v977 = vld [vmem:[%s5 + $0x60] sm:$0xf]
    %v978 = vld [vmem:[%s5 + $0x64] sm:$0xf]
    %v979 = vld [vmem:[%s5 + $0x68] sm:$0xf]
    %v980 = vld [vmem:[%s5 + $0x6c] sm:$0xf]
    %v981 = vld [vmem:[%s5 + $0x70] sm:$0xf]
    %v982 = vld [vmem:[%s5 + $0x74] sm:$0xf]
    %v983 = vld [vmem:[%s5 + $0x78] sm:$0xf]
    %v984 = vld [vmem:[%s5 + $0x7c] sm:$0xf]
    %v985 = vld [vmem:[%s5 + $0x80] sm:$0xf]
    %v986 = vld [vmem:[%s5 + $0x84] sm:$0xf]
    %v987 = vld [vmem:[%s5 + $0x88] sm:$0xf]
    %v988 = vld [vmem:[%s5 + $0x8c] sm:$0xf]
    %v989 = vld [vmem:[%s5 + $0x90] sm:$0xf]
    %v990 = vld [vmem:[%s5 + $0x94] sm:$0xf]
    %v991 = vld [vmem:[%s5 + $0x98] sm:$0xf]
    %v992 = vld [vmem:[%s5 + $0x9c] sm:$0xf]
    %v993 = vld [vmem:[%s5 + $0xa0] sm:$0xf]
    %v994 = vld [vmem:[%s5 + $0xa4] sm:$0xf]
    %v995 = vld [vmem:[%s5 + $0xa8] sm:$0xf]
    %v996 = vld [vmem:[%s5 + $0xac] sm:$0xf]
    %v997 = vld [vmem:[%s5 + $0xb0] sm:$0xf]
    %v998 = vld [vmem:[%s5 + $0xb4] sm:$0xf]
    %v999 = vld [vmem:[%s5 + $0xb8] sm:$0xf]
    %v1000 = vld [vmem:[%s5 + $0xbc] sm:$0xf]
    %v1001 = vld [vmem:[%s6] sm:$0x1]
    %v1003 = vperm.slane %v1001, 0
    %v1053 = vunpack.c.l.b16 %v953
    %v1054 = vunpack.c.l.b16 %v954
    %v1055 = vunpack.c.l.b16 %v955
    %v1056 = vunpack.c.l.b16 %v956
    %v1057 = vunpack.c.l.b16 %v957
    %v1058 = vunpack.c.l.b16 %v958
    %v1059 = vunpack.c.l.b16 %v959
    %v1060 = vunpack.c.l.b16 %v960
    %v1061 = vunpack.c.l.b16 %v961
    %v1062 = vunpack.c.l.b16 %v962
    %v1063 = vunpack.c.l.b16 %v963
    %v1064 = vunpack.c.l.b16 %v964
    %v1065 = vunpack.c.l.b16 %v965
    %v1066 = vunpack.c.l.b16 %v966
    %v1067 = vunpack.c.l.b16 %v967
    %v1068 = vunpack.c.l.b16 %v968
    %v1069 = vunpack.c.l.b16 %v969
    %v1070 = vunpack.c.l.b16 %v970
    %v1071 = vunpack.c.l.b16 %v971
    %v1072 = vunpack.c.l.b16 %v972
    %v1073 = vunpack.c.l.b16 %v973
    %v1074 = vunpack.c.l.b16 %v974
    %v1075 = vunpack.c.l.b16 %v975
    %v1076 = vunpack.c.l.b16 %v976
    %v1077 = vunpack.c.l.b16 %v977
    %v1078 = vunpack.c.l.b16 %v978
    %v1079 = vunpack.c.l.b16 %v979
    %v1080 = vunpack.c.l.b16 %v980
    %v1081 = vunpack.c.l.b16 %v981
    %v1082 = vunpack.c.l.b16 %v982
    %v1083 = vunpack.c.l.b16 %v983
    %v1084 = vunpack.c.l.b16 %v984
    %v1085 = vunpack.c.l.b16 %v985
    %v1086 = vunpack.c.l.b16 %v986
    %v1087 = vunpack.c.l.b16 %v987
    %v1088 = vunpack.c.l.b16 %v988
    %v1089 = vunpack.c.l.b16 %v989
    %v1090 = vunpack.c.l.b16 %v990
    %v1091 = vunpack.c.l.b16 %v991
    %v1092 = vunpack.c.l.b16 %v992
    %v1093 = vunpack.c.l.b16 %v993
    %v1094 = vunpack.c.l.b16 %v994
    %v1095 = vunpack.c.l.b16 %v995
    %v1096 = vunpack.c.l.b16 %v996
    %v1097 = vunpack.c.l.b16 %v997
    %v1098 = vunpack.c.l.b16 %v998
    %v1099 = vunpack.c.l.b16 %v999
    %v1100 = vunpack.c.l.b16 %v1000
    %v1101 = vpack.c.b16 %v1054, %v1053
    %v1102 = vpack.c.b16 %v1056, %v1055
    %v1103 = vpack.c.b16 %v1058, %v1057
    %v1104 = vpack.c.b16 %v1060, %v1059
    %v1105 = vpack.c.b16 %v1062, %v1061
    %v1106 = vpack.c.b16 %v1064, %v1063
    %v1107 = vpack.c.b16 %v1066, %v1065
    %v1108 = vpack.c.b16 %v1068, %v1067
    %v1109 = vpack.c.b16 %v1070, %v1069
    %v1110 = vpack.c.b16 %v1072, %v1071
    %v1111 = vpack.c.b16 %v1074, %v1073
    %v1112 = vpack.c.b16 %v1076, %v1075
    %v1113 = vpack.c.b16 %v1078, %v1077
    %v1114 = vpack.c.b16 %v1080, %v1079
    %v1115 = vpack.c.b16 %v1082, %v1081
    %v1116 = vpack.c.b16 %v1084, %v1083
    %v1117 = vpack.c.b16 %v1086, %v1085
    %v1118 = vpack.c.b16 %v1088, %v1087
    %v1119 = vpack.c.b16 %v1090, %v1089
    %v1120 = vpack.c.b16 %v1092, %v1091
    %v1121 = vpack.c.b16 %v1094, %v1093
    %v1122 = vpack.c.b16 %v1096, %v1095
    %v1123 = vpack.c.b16 %v1098, %v1097
    %v1124 = vpack.c.b16 %v1100, %v1099
    %1149 = vmatpush.bf16.msra.mxu0 %v1108
    %1150 = vmatpush.bf16.msra.mxu0 %v1107
    %1151 = vmatpush.bf16.msra.mxu0 %v1106
    %1152 = vmatpush.bf16.msra.mxu0 %v1105
    %1153 = vmatpush.bf16.msra.mxu0 %v1104
    %1154 = vmatpush.bf16.msra.mxu0 %v1103
    %1155 = vmatpush.bf16.msra.mxu0 %v1102
    %1156 = vmatpush.bf16.msra.mxu0 %v1101
    %1157 = vmatmul.bf16.gmra.mxu0 %v950
    %v1158 = vpop.f32.mrf.mxu0
    %v1159 = vadd.f32 %v1003, %v1158
    %v1160 = vpop.f32.mrf.mxu0
    %1161 = vdwg.mxu0
    %1162 = vmatpush.bf16.msra.mxu0 %v1116
    %1163 = vmatpush.bf16.msra.mxu0 %v1115
    %1164 = vmatpush.bf16.msra.mxu0 %v1114
    %1165 = vmatpush.bf16.msra.mxu0 %v1113
    %1166 = vmatpush.bf16.msra.mxu0 %v1112
    %1167 = vmatpush.bf16.msra.mxu0 %v1111
    %1168 = vmatpush.bf16.msra.mxu0 %v1110
    %1169 = vmatpush.bf16.msra.mxu0 %v1109
    %1170 = vmatmul.bf16.gmra.mxu0 %v951
    %v1171 = vpop.f32.mrf.mxu0
    %v1172 = vadd.f32 %v1159, %v1171
    %v1173 = vpop.f32.mrf.mxu0
    %1174 = vdwg.mxu0
    %1175 = vmatpush.bf16.msra.mxu0 %v1124
    %1176 = vmatpush.bf16.msra.mxu0 %v1123
    %1177 = vmatpush.bf16.msra.mxu0 %v1122
    %1178 = vmatpush.bf16.msra.mxu0 %v1121
    %1179 = vmatpush.bf16.msra.mxu0 %v1120
    %1180 = vmatpush.bf16.msra.mxu0 %v1119
    %1181 = vmatpush.bf16.msra.mxu0 %v1118
    %1182 = vmatpush.bf16.msra.mxu0 %v1117
    %1183 = vmatmul.bf16.gmra.mxu0 %v952
    %v1184 = vpop.f32.mrf.mxu0
    %v1185 = vadd.f32 %v1172, %v1184
    %v1186 = vpop.f32.mrf.mxu0
    %1187 = vdwg.mxu0
    %v1188 = vtanh.pop %v1185
    %vm1189 = vcmask 31744
    %1190 = vst.msk [vmem:[%s7] sm:$0xff] %vm1189, %v1188
    // Predicated region
    $region34: #{tpu_custom_call.1} parent=1 // pred_check
      _
    $region35: #{tpu_custom_call.1} parent=1 // pred_check_branch
      %1192 = sbr.rel (0) target = $region37
    $region36: #{tpu_custom_call.1} parent=1 // pred_region
      _
    $region37: #{tpu_custom_call.1} parent=1 // pred_fallthru
      _
    // Predicated region
    $region38: #{tpu_custom_call.1} parent=1 // pred_check
      _
    $region39: #{tpu_custom_call.1} parent=1 // pred_check_branch
      %1194 = sbr.rel (0) target = $region41
    $region40: #{tpu_custom_call.1} parent=1 // pred_region
      _
    $region41: #{tpu_custom_call.1} parent=1 // pred_fallthru
      _
    %1195 = vsyncpa [#allocation3], 1

</llo_original>
